<compile_context>
chip_gen: v7x
topology: tpu7x:2x2x1
jax: 0.10.0
libtpu: 0.0.40
codegen_flags: <defaults>
</compile_context>

<pallas_src>
import functools
import math

import jax
import jax.numpy as jnp
from jax.experimental import pallas as pl
from jax.experimental.pallas import tpu as pltpu


def _make_kernel(compute_dtype):
    inv_sqrt2 = 1.0 / math.sqrt(2.0)

    def kernel(xp_ref, w1_ref, b1_ref, w2_ref, b2_ref, o_ref):
        # Activation tile (tm, 4*d_v), already compute_dtype (cast in wrapper).
        xp = xp_ref[...]
        # Grid-invariant params: single resident VMEM copy (no double buffering).
        w1 = w1_ref[...]          # (4*d_v, d_l) compute_dtype, K order (kh, kw, ic)
        w2 = w2_ref[...]          # (d_l, d_l)   compute_dtype (transposed Linear W)
        b1 = b1_ref[...]          # (1, d_l) f32
        b2 = b2_ref[...]          # (1, d_l) f32

        # Conv2d(k=2, s=2) as a single GEMM with K = 4*d_v; f32 accumulation.
        h = jnp.dot(xp, w1, preferred_element_type=jnp.float32) + b1
        # Exact (erf) GELU in f32 -- matches torch.nn.GELU(approximate='none').
        g = 0.5 * h * (1.0 + jax.lax.erf(h * inv_sqrt2))
        # Linear(d_l, d_l) + bias; one lane-dense store for the whole tile.
        y = jnp.dot(g.astype(compute_dtype), w2,
                    preferred_element_type=jnp.float32) + b2
        o_ref[...] = y.astype(o_ref.dtype)

    return kernel


def _device_vmem_bytes(default=64 << 20):
    """Physical VMEM of the local TPU; conservative 64 MiB (v7x) fallback."""
    try:
        return int(pltpu.get_tpu_info().vmem_capacity_bytes)
    except Exception:
        return int(default)


def pooler_projector(x, conv_w, conv_b, lin_w, lin_b, hw, *,
                     compute_dtype=jnp.bfloat16, row_tile=None):
    """Fused PoolerProjector forward.

    x:      (B, hw*hw, d_v)
    conv_w: (d_l, d_v, 2, 2)   conv_b: (d_l,)   (PyTorch Conv2d layout)
    lin_w:  (d_l, d_l)         lin_b:  (d_l,)   (PyTorch Linear layout)
    returns (B, (hw//2)**2, d_l)
    """
    B, N, d_v = x.shape
    assert N == hw * hw and hw % 2 == 0
    d_l = conv_w.shape[0]
    ho = hw // 2
    M = B * ho * ho                               # total output pixels (GEMM M)

    # Gather every 2x2/stride-2 patch into one GEMM row; lane order (kh, kw, c).
    # Row order is (b, oh, ow) which matches the PyTorch flatten(2) pixel order.
    xp = (x.reshape(B, ho, 2, ho, 2, d_v)
           .transpose(0, 1, 3, 2, 4, 5)
           .reshape(M, 4 * d_v)
           .astype(compute_dtype))

    # Conv weight (oc, ic, kh, kw) -> (kh, kw, ic, oc) -> (4*d_v, d_l); single
    # fused conv weight (one K=4*d_v contraction).  Linear: y = g @ W.T + b.
    w1 = conv_w.transpose(2, 3, 1, 0).reshape(4 * d_v, d_l).astype(compute_dtype)
    w2 = lin_w.T.astype(compute_dtype)
    b1 = conv_b.reshape(1, d_l).astype(jnp.float32)
    b2 = lin_b.reshape(1, d_l).astype(jnp.float32)

    itemsize_c = jnp.dtype(compute_dtype).itemsize
    itemsize_o = x.dtype.itemsize
    w_bytes = (4 * d_v * d_l + d_l * d_l) * itemsize_c + 2 * d_l * 4
    vmem_cap = _device_vmem_bytes()

    # Row tile: multiple of 8 (sublane granule) or the full row count; prefer
    # >= 2 grid steps (v7x megacore sharding) and ~512 rows (MXU M utilization /
    # v6e roofline), capped by the device VMEM budget.
    if row_tile is not None:
        tm = max(1, min(int(row_tile), M))
        if tm < M:
            tm = max(8, (tm // 8) * 8)
    elif M <= 16:
        tm = M
    else:
        per_row_db = 2 * (4 * d_v * itemsize_c + d_l * itemsize_o)   # dbl-buffered in+out
        budget = max(4 << 20, int(0.7 * (vmem_cap - w_bytes)))
        tm_cap = max(8, (budget // per_row_db) // 8 * 8)
        half_m = max(8, (M // 2) // 8 * 8)
        tm = max(8, min(512, half_m, tm_cap))

    # Pad M so every block is full -> no erf/GELU on undefined padding rows.
    n_blocks = pl.cdiv(M, tm)
    Mg = n_blocks * tm
    if Mg != M:
        xp = jnp.pad(xp, ((0, Mg - M), (0, 0)))

    cost = pl.CostEstimate(
        flops=2 * M * (4 * d_v * d_l + d_l * d_l),
        transcendentals=M * d_l,
        bytes_accessed=int(Mg * 4 * d_v * itemsize_c + w_bytes + Mg * d_l * itemsize_o),
    )

    vmem_need = (2 * (tm * 4 * d_v * itemsize_c)      # double-buffered activation tile
                 + 2 * (tm * d_l * itemsize_o)        # double-buffered output tile
                 + w_bytes                            # resident weights/biases
                 + (8 << 20))                         # compiler scratch / slack
    vmem_limit = int(min(max(vmem_need, 32 << 20), vmem_cap))

    out2 = pl.pallas_call(
        _make_kernel(compute_dtype),
        out_shape=jax.ShapeDtypeStruct((Mg, d_l), x.dtype),
        grid=(n_blocks,),
        in_specs=[
            # Pipelined activation tile: tm output pixels x 4*d_v patch features.
            pl.BlockSpec((tm, 4 * d_v), lambda i: (i, 0)),
            # Grid-invariant params: whole array, single resident VMEM copy.
            pl.BlockSpec(memory_space=pltpu.MemorySpace.VMEM),
            pl.BlockSpec(memory_space=pltpu.MemorySpace.VMEM),
            pl.BlockSpec(memory_space=pltpu.MemorySpace.VMEM),
            pl.BlockSpec(memory_space=pltpu.MemorySpace.VMEM),
        ],
        # Lane-dense output slab, written once per tile.
        out_specs=pl.BlockSpec((tm, d_l), lambda i: (i, 0)),
        compiler_params=pltpu.CompilerParams(
            dimension_semantics=("parallel",),
            vmem_limit_bytes=vmem_limit,
        ),
        cost_estimate=cost,
    )(xp, w1, b1, w2, b2)

    # (Mg, d_l) -> drop pad -> (B, ho*ho, d_l): free contiguous reshape.
    return out2[:M].reshape(B, ho * ho, d_l)


def _reference(x, conv_w, conv_b, lin_w, lin_b, hw):
    """Plain-JAX reference mirroring the PyTorch forward (sanity check)."""
    B, N, d_v = x.shape
    assert N == hw * hw
    xb = x.reshape(B, hw, hw, d_v).transpose(0, 3, 1, 2)          # NCHW
    y = jax.lax.conv_general_dilated(
        xb, conv_w, window_strides=(2, 2), padding="VALID",
        dimension_numbers=("NCHW", "OIHW", "NCHW"),
    ) + conv_b[None, :, None, None]
    y = y.reshape(B, conv_w.shape[0], -1).transpose(0, 2, 1)      # (B, Nout, d_l)
    y = jax.nn.gelu(y, approximate=False)
    return y @ lin_w.T + lin_b


if __name__ == "__main__":
    # vision_cfg.image_size = 32, vision_cfg.patch_size = 2  =>  hw = 16
    B, hw, d_v, d_l = 2, 16, 32, 32
    ho = hw // 2

    key = jax.random.PRNGKey(0)
    k_x, k_cw, k_cb, k_lw, k_lb = jax.random.split(key, 5)
    x = jax.random.normal(k_x, (B, hw * hw, d_v), dtype=jnp.float32)
    conv_w = jax.random.normal(k_cw, (d_l, d_v, 2, 2), dtype=jnp.float32) * 0.05
    conv_b = jax.random.normal(k_cb, (d_l,), dtype=jnp.float32) * 0.05
    lin_w = jax.random.normal(k_lw, (d_l, d_l), dtype=jnp.float32) * 0.05
    lin_b = jax.random.normal(k_lb, (d_l,), dtype=jnp.float32) * 0.05

    ref = _reference(x, conv_w, conv_b, lin_w, lin_b, hw)

    # float32 compute path, explicit row tile -> grid=(2,) exercises pipelining;
    # matches the PyTorch (f32) forward tightly.
    run_f32 = jax.jit(functools.partial(
        pooler_projector, hw=hw, compute_dtype=jnp.float32, row_tile=64))
    out_f32 = jax.block_until_ready(run_f32(x, conv_w, conv_b, lin_w, lin_b))
    assert out_f32.shape == (B, ho * ho, d_l), out_f32.shape
    assert jnp.allclose(out_f32, ref, atol=2e-4, rtol=2e-4), "f32 mismatch vs reference"

    # Default bf16-MXU path with auto tile sizing (f32 accumulation).
    run_bf16 = jax.jit(functools.partial(
        pooler_projector, hw=hw, compute_dtype=jnp.bfloat16))
    out_bf16 = jax.block_until_ready(run_bf16(x, conv_w, conv_b, lin_w, lin_b))
    assert out_bf16.shape == (B, ho * ho, d_l), out_bf16.shape
    assert jnp.allclose(out_bf16, ref, atol=3e-2, rtol=3e-2), "bf16 mismatch vs reference"

    print("KERNEL_OK")
</pallas_src>

<mosaic_0001>
module attributes {stable_mosaic.version = 11 : i64} {
  func.func @kernel(%arg0: i32, %arg1: memref<64x128xf32, #tpu.memory_space<vmem>>, %arg2: memref<128x32xf32, #tpu.memory_space<vmem>>, %arg3: memref<1x32xf32, #tpu.memory_space<vmem>>, %arg4: memref<32x32xf32, #tpu.memory_space<vmem>>, %arg5: memref<1x32xf32, #tpu.memory_space<vmem>>, %arg6: memref<64x32xf32, #tpu.memory_space<vmem>>) attributes {dimension_semantics = [#tpu.dimension_semantics<parallel>], iteration_bounds = array<i64: 2>, scalar_prefetch = 0 : i64, scratch_operands = 0 : i64, tpu.core_type = #tpu.core_type<tc>, window_params = [{transform_indices = @transform_0, window_bounds = array<i64: 64, 128>}, {pipeline_mode = #tpu.pipeline_mode<synchronous>, transform_indices = @transform_1, window_bounds = array<i64: 128, 32>}, {pipeline_mode = #tpu.pipeline_mode<synchronous>, transform_indices = @transform_2, window_bounds = array<i64: 1, 32>}, {pipeline_mode = #tpu.pipeline_mode<synchronous>, transform_indices = @transform_3, window_bounds = array<i64: 32, 32>}, {pipeline_mode = #tpu.pipeline_mode<synchronous>, transform_indices = @transform_4, window_bounds = array<i64: 1, 32>}, {transform_indices = @transform_5, window_bounds = array<i64: 64, 32>}]} {
    %c0 = arith.constant 0 : index
    %c0_0 = arith.constant 0 : index
    %0 = vector.load %arg1[%c0, %c0_0] : memref<64x128xf32, #tpu.memory_space<vmem>>, vector<64x128xf32>
    %c0_1 = arith.constant 0 : index
    %c0_2 = arith.constant 0 : index
    %1 = vector.load %arg2[%c0_1, %c0_2] : memref<128x32xf32, #tpu.memory_space<vmem>>, vector<128x32xf32>
    %c0_3 = arith.constant 0 : index
    %c0_4 = arith.constant 0 : index
    %2 = vector.load %arg4[%c0_3, %c0_4] : memref<32x32xf32, #tpu.memory_space<vmem>>, vector<32x32xf32>
    %c0_5 = arith.constant 0 : index
    %c0_6 = arith.constant 0 : index
    %3 = vector.load %arg3[%c0_5, %c0_6] : memref<1x32xf32, #tpu.memory_space<vmem>>, vector<1x32xf32>
    %c0_7 = arith.constant 0 : index
    %c0_8 = arith.constant 0 : index
    %4 = vector.load %arg5[%c0_7, %c0_8] : memref<1x32xf32, #tpu.memory_space<vmem>>, vector<1x32xf32>
    %cst = arith.constant dense<0.000000e+00> : vector<64x32xf32>
    %5 = tpu.matmul %0, %1, %cst {dimension_numbers = #tpu.dot_dimension_numbers<[1], [0], [0], [1], [0, 0, 1, 1], [], []>} : vector<64x128xf32>, vector<128x32xf32>, vector<64x32xf32> -> vector<64x32xf32>
    %6 = vector.broadcast %3 : vector<1x32xf32> to vector<64x32xf32>
    %7 = arith.addf %5, %6 : vector<64x32xf32>
    %cst_9 = arith.constant 5.000000e-01 : f32
    %8 = vector.broadcast %cst_9 : f32 to vector<64x32xf32>
    %9 = arith.mulf %8, %7 : vector<64x32xf32>
    %cst_10 = arith.constant 0.707106769 : f32
    %10 = vector.broadcast %cst_10 : f32 to vector<64x32xf32>
    %11 = arith.mulf %7, %10 : vector<64x32xf32>
    %12 = math.erf %11 : vector<64x32xf32>
    %cst_11 = arith.constant 1.000000e+00 : f32
    %13 = vector.broadcast %cst_11 : f32 to vector<64x32xf32>
    %14 = arith.addf %13, %12 : vector<64x32xf32>
    %15 = arith.mulf %9, %14 : vector<64x32xf32>
    %cst_12 = arith.constant dense<0.000000e+00> : vector<64x32xf32>
    %16 = tpu.matmul %15, %2, %cst_12 {dimension_numbers = #tpu.dot_dimension_numbers<[1], [0], [0], [1], [0, 0, 1, 1], [], []>} : vector<64x32xf32>, vector<32x32xf32>, vector<64x32xf32> -> vector<64x32xf32>
    %17 = vector.broadcast %4 : vector<1x32xf32> to vector<64x32xf32>
    %18 = arith.addf %16, %17 : vector<64x32xf32>
    %c0_13 = arith.constant 0 : index
    %c0_14 = arith.constant 0 : index
    %19 = vector.load %arg6[%c0_13, %c0_14] : memref<64x32xf32, #tpu.memory_space<vmem>>, vector<64x32xf32>
    tpu.vector_store %arg6[%c0_13, %c0_14], %18 {strides = array<i32>} : memref<64x32xf32, #tpu.memory_space<vmem>>, vector<64x32xf32>,
    return
  }
  func.func @transform_0(%arg0: i32) -> (i32, i32) {
    %c0_i32 = arith.constant 0 : i32
    %c0_i32_0 = arith.constant 0 : i32
    return %arg0, %c0_i32 : i32, i32
  }
  func.func @transform_1(%arg0: i32) -> (i32, i32) {
    %c0_i32 = arith.constant 0 : i32
    %c0_i32_0 = arith.constant 0 : i32
    %c0_i32_1 = arith.constant 0 : i32
    return %c0_i32, %c0_i32_0 : i32, i32
  }
  func.func @transform_2(%arg0: i32) -> (i32, i32) {
    %c0_i32 = arith.constant 0 : i32
    %c0_i32_0 = arith.constant 0 : i32
    %c0_i32_1 = arith.constant 0 : i32
    return %c0_i32, %c0_i32_0 : i32, i32
  }
  func.func @transform_3(%arg0: i32) -> (i32, i32) {
    %c0_i32 = arith.constant 0 : i32
    %c0_i32_0 = arith.constant 0 : i32
    %c0_i32_1 = arith.constant 0 : i32
    return %c0_i32, %c0_i32_0 : i32, i32
  }
  func.func @transform_4(%arg0: i32) -> (i32, i32) {
    %c0_i32 = arith.constant 0 : i32
    %c0_i32_0 = arith.constant 0 : i32
    %c0_i32_1 = arith.constant 0 : i32
    return %c0_i32, %c0_i32_0 : i32, i32
  }
  func.func @transform_5(%arg0: i32) -> (i32, i32) {
    %c0_i32 = arith.constant 0 : i32
    %c0_i32_0 = arith.constant 0 : i32
    return %arg0, %c0_i32 : i32, i32
  }
}

</mosaic_0001>

<llo_original>
// kernel: pooler_projector.1
$region0: #{pooler_projector.1}
  #allocation0 [shape = 'u32[]', space=smem, size = 0x4, offset = 0x4, fixed_abs, tag = 'smem constant byte address 0x4 - core index']
  #allocation1 [shape = 'u32[144,128]{1,0:T(1,128)}', space=vmem, size = 0x12000, scoped, tag = 'internal scratch']
  %s0 = inlined_call_operand.vmem [shape: f32[128,128], index: 0, kind: input, shape index: {}]
  %s1 = inlined_call_operand.vmem [shape: f32[128,32], index: 1, kind: input, shape index: {}]
  %s2 = inlined_call_operand.vmem [shape: f32[1,32], index: 2, kind: input, shape index: {}]
  %s3 = inlined_call_operand.vmem [shape: f32[32,32], index: 3, kind: input, shape index: {}]
  %s4 = inlined_call_operand.vmem [shape: f32[1,32], index: 4, kind: input, shape index: {}]
  %s5 = inlined_call_operand.vmem [shape: f32[128,32], index: 5, kind: output, shape index: {}]
  %s6 = sld [smem:[#allocation0]]
  $region53: #{pooler_projector.1} parent=0
    _
  %s8 = ssub.s32 1, %s6
  %s9 = scalar_select 0, %s8, %s6
  loop: start=0, step=1, limit=4
  $region2: #{pooler_projector.1} parent=0 // loop_pre_header
    _
  $region3: #{pooler_projector.1} parent=0 // loop_header
    %s11 = sphi 0, %s15
    %p12 = scmp.ge.s32.totalorder %s11, 4
    %s21 = sphi 0, %s23
    %s24 = sphi 0, %s21
    %s25 = sphi 0, %s24
    %s41 = sphi 0, %s25
    %s45 = sphi 0, %s45
    %s47 = sphi 0, %s45
    %s48 = sphi 0, %s47
    %s62 = sphi 0, %s48
    %s66 = sphi 0, %s66
    %s68 = sphi 0, %s66
    %s69 = sphi 0, %s68
    %s83 = sphi 0, %s69
    %s87 = sphi 0, %s87
    %s89 = sphi 0, %s87
    %s90 = sphi 0, %s89
    %s104 = sphi 0, %s90
    %s108 = sphi 0, %s108
    %s110 = sphi 0, %s108
    %s111 = sphi 0, %s110
    %s125 = sphi 0, %s111
    %s131 = sphi 0, %s133
    %s134 = sphi 0, %s131
    %s135 = sphi 0, %s134
    %s151 = sphi 0, %s135
  $region4: #{pooler_projector.1} parent=0 // loop_header_branch
    %14 = sbr.rel (%p12) target = $region8
  $region5: #{pooler_projector.1} parent=0 // loop_body
    %s16 = ssub.s32 %s11, 1
    %s17 = ssub.s32 %s11, 2
    %s18 = sadd.s32 %s11, 1
    %s19 = ssub.s32 %s11, %s18
    %p20 = scmp.eq.s32.totalorder %s19, 0
    %s22 = sadd.s32 %s21, 1
    %s23 = scalar_select %p20, %s21, %s22
    %p26 = pneg %p20
    %p27 = scmp.eq.s32.totalorder %s11, 1
    %p28 = por %p26, %p27
    %p29 = scmp.ne.s32.totalorder %s21, %s24
    %p30 = scmp.eq.s32.totalorder %s11, 0
    %p31 = por %p29, %p30
    %p32 = scmp.ne.s32.totalorder %s21, %s24
    %p33 = scmp.eq.s32.totalorder %s16, 1
    %p34 = por %p32, %p33
    %p35 = scmp.ne.s32.totalorder %s24, %s25
    %p36 = scmp.eq.s32.totalorder %s16, 0
    %p37 = por %p35, %p36
    %p38 = scmp.ne.s32.totalorder %s24, %s25
    %p39 = scmp.eq.s32.totalorder %s17, 1
    %p40 = por %p38, %p39
    %p42 = scmp.ne.s32.totalorder %s25, %s41
    %p43 = scmp.eq.s32.totalorder %s17, 0
    %p44 = por %p42, %p43
    %s46 = sadd.s32 %s45, 1
    %p49 = scmp.eq.s32.totalorder %s11, 1
    %p50 = scmp.ne.s32.totalorder %s45, %s47
    %p51 = scmp.eq.s32.totalorder %s11, 0
    %p52 = por %p50, %p51
    %p53 = scmp.ne.s32.totalorder %s45, %s47
    %p54 = scmp.eq.s32.totalorder %s16, 1
    %p55 = por %p53, %p54
    %p56 = scmp.ne.s32.totalorder %s47, %s48
    %p57 = scmp.eq.s32.totalorder %s16, 0
    %p58 = por %p56, %p57
    %p59 = scmp.ne.s32.totalorder %s47, %s48
    %p60 = scmp.eq.s32.totalorder %s17, 1
    %p61 = por %p59, %p60
    %p63 = scmp.ne.s32.totalorder %s48, %s62
    %p64 = scmp.eq.s32.totalorder %s17, 0
    %p65 = por %p63, %p64
    %s67 = sadd.s32 %s66, 1
    %p70 = scmp.eq.s32.totalorder %s11, 1
    %p71 = scmp.ne.s32.totalorder %s66, %s68
    %p72 = scmp.eq.s32.totalorder %s11, 0
    %p73 = por %p71, %p72
    %p74 = scmp.ne.s32.totalorder %s66, %s68
    %p75 = scmp.eq.s32.totalorder %s16, 1
    %p76 = por %p74, %p75
    %p77 = scmp.ne.s32.totalorder %s68, %s69
    %p78 = scmp.eq.s32.totalorder %s16, 0
    %p79 = por %p77, %p78
    %p80 = scmp.ne.s32.totalorder %s68, %s69
    %p81 = scmp.eq.s32.totalorder %s17, 1
    %p82 = por %p80, %p81
    %p84 = scmp.ne.s32.totalorder %s69, %s83
    %p85 = scmp.eq.s32.totalorder %s17, 0
    %p86 = por %p84, %p85
    %s88 = sadd.s32 %s87, 1
    %p91 = scmp.eq.s32.totalorder %s11, 1
    %p92 = scmp.ne.s32.totalorder %s87, %s89
    %p93 = scmp.eq.s32.totalorder %s11, 0
    %p94 = por %p92, %p93
    %p95 = scmp.ne.s32.totalorder %s87, %s89
    %p96 = scmp.eq.s32.totalorder %s16, 1
    %p97 = por %p95, %p96
    %p98 = scmp.ne.s32.totalorder %s89, %s90
    %p99 = scmp.eq.s32.totalorder %s16, 0
    %p100 = por %p98, %p99
    %p101 = scmp.ne.s32.totalorder %s89, %s90
    %p102 = scmp.eq.s32.totalorder %s17, 1
    %p103 = por %p101, %p102
    %p105 = scmp.ne.s32.totalorder %s90, %s104
    %p106 = scmp.eq.s32.totalorder %s17, 0
    %p107 = por %p105, %p106
    %s109 = sadd.s32 %s108, 1
    %p112 = scmp.eq.s32.totalorder %s11, 1
    %p113 = scmp.ne.s32.totalorder %s108, %s110
    %p114 = scmp.eq.s32.totalorder %s11, 0
    %p115 = por %p113, %p114
    %p116 = scmp.ne.s32.totalorder %s108, %s110
    %p117 = scmp.eq.s32.totalorder %s16, 1
    %p118 = por %p116, %p117
    %p119 = scmp.ne.s32.totalorder %s110, %s111
    %p120 = scmp.eq.s32.totalorder %s16, 0
    %p121 = por %p119, %p120
    %p122 = scmp.ne.s32.totalorder %s110, %s111
    %p123 = scmp.eq.s32.totalorder %s17, 1
    %p124 = por %p122, %p123
    %p126 = scmp.ne.s32.totalorder %s111, %s125
    %p127 = scmp.eq.s32.totalorder %s17, 0
    %p128 = por %p126, %p127
    %s129 = ssub.s32 %s11, %s18
    %p130 = scmp.eq.s32.totalorder %s129, 0
    %s132 = sadd.s32 %s131, 1
    %s133 = scalar_select %p130, %s131, %s132
    %p136 = pneg %p130
    %p137 = scmp.eq.s32.totalorder %s11, 1
    %p138 = por %p136, %p137
    %p139 = scmp.ne.s32.totalorder %s131, %s134
    %p140 = scmp.eq.s32.totalorder %s11, 0
    %p141 = por %p139, %p140
    %p142 = scmp.ne.s32.totalorder %s131, %s134
    %p143 = scmp.eq.s32.totalorder %s16, 1
    %p144 = por %p142, %p143
    %p145 = scmp.ne.s32.totalorder %s134, %s135
    %p146 = scmp.eq.s32.totalorder %s16, 0
    %p147 = por %p145, %p146
    %p148 = scmp.ne.s32.totalorder %s134, %s135
    %p149 = scmp.eq.s32.totalorder %s17, 1
    %p150 = por %p148, %p149
    %p152 = scmp.ne.s32.totalorder %s135, %s151
    %p153 = scmp.eq.s32.totalorder %s17, 0
    %p154 = por %p152, %p153
    %p155 = scmp.le.s32.totalorder 1, %s11
    %p156 = scmp.lt.s32.totalorder %s11, 3
    %p157 = pnand %p155, %p156
    %p158 = pneg %p157
    // Predicated region
    $region9: #{pooler_projector.1} parent=5 // pred_check
      _
    $region10: #{pooler_projector.1} parent=5 // pred_check_branch
      %160 = sbr.rel (%p157) target = $region12
    $region11: #{pooler_projector.1} parent=5 // pred_region
      %s161 = ssub.s32 %s11, 1
      // Predicated region
      $region13: #{pooler_projector.1} parent=11 // pred_check
        %p162 = pneg %p58
      $region14: #{pooler_projector.1} parent=11 // pred_check_branch
        %164 = sbr.rel (%p162) target = $region16
      $region15: #{pooler_projector.1} parent=11 // pred_region
        _
      $region16: #{pooler_projector.1} parent=11 // pred_fallthru
        _
      // Predicated region
      $region17: #{pooler_projector.1} parent=11 // pred_check
        %p165 = pneg %p79
      $region18: #{pooler_projector.1} parent=11 // pred_check_branch
        %167 = sbr.rel (%p165) target = $region20
      $region19: #{pooler_projector.1} parent=11 // pred_region
        _
      $region20: #{pooler_projector.1} parent=11 // pred_fallthru
        _
      // Predicated region
      $region21: #{pooler_projector.1} parent=11 // pred_check
        %p168 = pneg %p100
      $region22: #{pooler_projector.1} parent=11 // pred_check_branch
        %170 = sbr.rel (%p168) target = $region24
      $region23: #{pooler_projector.1} parent=11 // pred_region
        _
      $region24: #{pooler_projector.1} parent=11 // pred_fallthru
        _
      // Predicated region
      $region25: #{pooler_projector.1} parent=11 // pred_check
        %p171 = pneg %p121
      $region26: #{pooler_projector.1} parent=11 // pred_check_branch
        %173 = sbr.rel (%p171) target = $region28
      $region27: #{pooler_projector.1} parent=11 // pred_region
        _
      $region28: #{pooler_projector.1} parent=11 // pred_fallthru
        _
    $region12: #{pooler_projector.1} parent=5 // pred_fallthru
      _
    %p174 = scmp.lt.s32.totalorder %s11, 2
    // Predicated region
    $region29: #{pooler_projector.1} parent=5 // pred_check
      %p175 = pneg %p174
    $region30: #{pooler_projector.1} parent=5 // pred_check_branch
      %177 = sbr.rel (%p175) target = $region32
    $region31: #{pooler_projector.1} parent=5 // pred_region
      // Predicated region
      $region33: #{pooler_projector.1} parent=31 // pred_check
        %p178 = pneg %p31
      $region34: #{pooler_projector.1} parent=31 // pred_check_branch
        %180 = sbr.rel (%p178) target = $region36
      $region35: #{pooler_projector.1} parent=31 // pred_region
        %s181 = smul.u32 8, %s11
        %p182 = scmp.lt.s32.totalorder %s181, 15
        %s183 = scalar_select %p182, %s181, 15
        %s184 = smul.addr %s183, 8
        %s185 = scalar_lea.vmem %s0, %s184
        %s186 = smul.u32 8, %s11
      $region36: #{pooler_projector.1} parent=31 // pred_fallthru
        _
    $region32: #{pooler_projector.1} parent=5 // pred_fallthru
      _
    %p187 = scmp.le.s32.totalorder 1, %s11
    %p188 = scmp.lt.s32.totalorder %s11, 3
    %p189 = pnand %p187, %p188
    %p190 = pneg %p189
    // Predicated region
    $region37: #{pooler_projector.1} parent=5 // pred_check
      _
    $region38: #{pooler_projector.1} parent=5 // pred_check_branch
      %192 = sbr.rel (%p189) target = $region40
    $region39: #{pooler_projector.1} parent=5 // pred_region
      %s193 = ssub.s32 %s11, 1
      %s194 = smul.u32 8, %s16
      %p195 = scmp.lt.s32.totalorder %s194, 15
      %s196 = scalar_select %p195, %s194, 15
      %s197 = smul.addr %s196, 8
      %s198 = scalar_lea.vmem %s0, %s197
      %p199 = pneg %p37
      %p200 = pneg %p34
      %p201 = pneg %p58
      %p202 = pneg %p55
      %p203 = pneg %p79
      %p204 = pneg %p76
      %p205 = pneg %p100
      %p206 = pneg %p97
      %p207 = pneg %p121
      %p208 = pneg %p118
      %p209 = pneg %p147
      %p210 = pneg %p144
      %s211 = smul.u32 8, %s16
      %p212 = scmp.lt.s32.totalorder %s211, 15
      %s213 = scalar_select %p212, %s211, 15
      %s214 = smul.addr %s213, 8
      %s215 = scalar_lea.vmem %s5, %s214
      %s216 = smul.u32 8, %s16
      %p217 = scmp.lt.s32.totalorder %s216, 15
      %s218 = scalar_select %p217, %s216, 15
      %s219 = smul.addr %s218, 8
      %s220 = scalar_lea.vmem %s0, %s219
      %s221 = smul.u32 8, %s16
      %s222 = smul.u32 8, %s16
      %p223 = scmp.lt.s32.totalorder %s222, 15
      %s224 = scalar_select %p223, %s222, 15
      %s225 = smul.addr %s224, 8
      %s226 = scalar_lea.vmem %s5, %s225
      %s227 = smul.u32 8, %s16
      %v228 = vld [vmem:[%s220] sm:$0xff]
      %v229 = vld [vmem:[%s220 + $0x8] sm:$0xff]
      %v230 = vld [vmem:[%s220 + $0x10] sm:$0xff]
      %v231 = vld [vmem:[%s220 + $0x18] sm:$0xff]
      %v232 = vld [vmem:[%s220 + $0x20] sm:$0xff]
      %v233 = vld [vmem:[%s220 + $0x28] sm:$0xff]
      %v234 = vld [vmem:[%s220 + $0x30] sm:$0xff]
      %v235 = vld [vmem:[%s220 + $0x38] sm:$0xff]
      %v236 = vld [vmem:[%s1] sm:$0xff]
      %v237 = vld [vmem:[%s1 + $0x8] sm:$0xff]
      %v238 = vld [vmem:[%s1 + $0x10] sm:$0xff]
      %v239 = vld [vmem:[%s1 + $0x18] sm:$0xff]
      %v240 = vld [vmem:[%s1 + $0x20] sm:$0xff]
      %v241 = vld [vmem:[%s1 + $0x28] sm:$0xff]
      %v242 = vld [vmem:[%s1 + $0x30] sm:$0xff]
      %v243 = vld [vmem:[%s1 + $0x38] sm:$0xff]
      %v244 = vld [vmem:[%s1 + $0x40] sm:$0xff]
      %v245 = vld [vmem:[%s1 + $0x48] sm:$0xff]
      %v246 = vld [vmem:[%s1 + $0x50] sm:$0xff]
      %v247 = vld [vmem:[%s1 + $0x58] sm:$0xff]
      %v248 = vld [vmem:[%s1 + $0x60] sm:$0xff]
      %v249 = vld [vmem:[%s1 + $0x68] sm:$0xff]
      %v250 = vld [vmem:[%s1 + $0x70] sm:$0xff]
      %v251 = vld [vmem:[%s1 + $0x78] sm:$0xff]
      %v252 = vld [vmem:[%s3] sm:$0xff]
      %v253 = vld [vmem:[%s3 + $0x8] sm:$0xff]
      %v254 = vld [vmem:[%s3 + $0x10] sm:$0xff]
      %v255 = vld [vmem:[%s3 + $0x18] sm:$0xff]
      %v256 = vld [vmem:[%s2] sm:$0x1]
      %v257 = vld [vmem:[%s4] sm:$0x1]
      %v259 = vlaneseq
      %v260 = vshrl.u32 %v259, 7
      %v261 = vsub.s32 0, %v260
      %v262 = vrot.slane %v256, %v261
      %264 = vmatprep.subr.mxu0 0.0
      %265 = vmatpush1.msra.mxu0 %v236
      %266 = vmatprep.subr.mxu0 0.0
      %267 = vmatpush1.msra.mxu0 %v237
      %268 = vmatprep.subr.mxu0 0.0
      %269 = vmatpush1.msra.mxu0 %v238
      %270 = vmatprep.subr.mxu0 0.0
      %271 = vmatpush1.msra.mxu0 %v239
      %272 = vmatprep.subr.mxu0 0.0
      %273 = vmatpush1.msra.mxu0 %v240
      %274 = vmatprep.subr.mxu0 0.0
      %275 = vmatpush1.msra.mxu0 %v241
      %276 = vmatprep.subr.mxu0 0.0
      %277 = vmatpush1.msra.mxu0 %v242
      %278 = vmatprep.subr.mxu0 0.0
      %279 = vmatpush1.msra.mxu0 %v243
      %280 = vmatprep.subr.mxu0 0.0
      %281 = vmatpush1.msra.mxu0 %v244
      %282 = vmatprep.subr.mxu0 0.0
      %283 = vmatpush1.msra.mxu0 %v245
      %284 = vmatprep.subr.mxu0 0.0
      %285 = vmatpush1.msra.mxu0 %v246
      %286 = vmatprep.subr.mxu0 0.0
      %287 = vmatpush1.msra.mxu0 %v247
      %288 = vmatprep.subr.mxu0 0.0
      %289 = vmatpush1.msra.mxu0 %v248
      %290 = vmatprep.subr.mxu0 0.0
      %291 = vmatpush1.msra.mxu0 %v249
      %292 = vmatprep.subr.mxu0 0.0
      %293 = vmatpush1.msra.mxu0 %v250
      %294 = vmatprep.subr.mxu0 0.0
      %295 = vmatpush1.msra.mxu0 %v251
      %296 = vmatprep.subr.mxu0 0.0
      %297 = vmatpush1.msra.mxu0 0.0
      %298 = vmatprep.subr.mxu0 0.0
      %299 = vmatpush1.msra.mxu0 0.0
      %300 = vmatprep.subr.mxu0 0.0
      %301 = vmatpush1.msra.mxu0 0.0
      %302 = vmatprep.subr.mxu0 0.0
      %303 = vmatpush1.msra.mxu0 0.0
      %304 = vmatprep.subr.mxu0 0.0
      %305 = vmatpush1.msra.mxu0 0.0
      %306 = vmatprep.subr.mxu0 0.0
      %307 = vmatpush1.msra.mxu0 0.0
      %308 = vmatprep.subr.mxu0 0.0
      %309 = vmatpush1.msra.mxu0 0.0
      %310 = vmatprep.subr.mxu0 0.0
      %311 = vmatpush1.msra.mxu0 0.0
      %312 = vmatprep.subr.mxu0 0.0
      %313 = vmatpush1.msra.mxu0 0.0
      %314 = vmatprep.subr.mxu0 0.0
      %315 = vmatpush1.msra.mxu0 0.0
      %316 = vmatprep.subr.mxu0 0.0
      %317 = vmatpush1.msra.mxu0 0.0
      %318 = vmatprep.subr.mxu0 0.0
      %319 = vmatpush1.msra.mxu0 0.0
      %320 = vmatprep.subr.mxu0 0.0
      %321 = vmatpush1.msra.mxu0 0.0
      %322 = vmatprep.subr.mxu0 0.0
      %323 = vmatpush1.msra.mxu0 0.0
      %324 = vmatprep.subr.mxu0 0.0
      %325 = vmatpush1.msra.mxu0 0.0
      %326 = vmatprep.subr.mxu0 0.0
      %327 = vmatpush1.msra.mxu0 0.0
      %328 = vmatprep.mubr.f32.mxu0 0.0
      %329 = vmatmul.mubr.f32.gmra.mrb[0].mxu0 %v228
      %v330 = vpop.f32.mrb[0].mxu0
      %v331 = vadd.f32 %v262, %v330
      %v332 = vpop.f32.mrb[0].mxu0
      %333 = vmatprep.mubr.f32.mxu0 0.0
      %334 = vmatmul.mubr.f32.gmra.mrb[0].mxu0 %v229
      %v335 = vpop.f32.mrb[0].mxu0
      %v336 = vadd.f32 %v262, %v335
      %v337 = vpop.f32.mrb[0].mxu0
      %338 = vmatprep.mubr.f32.mxu0 0.0
      %339 = vmatmul.mubr.f32.gmra.mrb[0].mxu0 %v230
      %v340 = vpop.f32.mrb[0].mxu0
      %v341 = vadd.f32 %v262, %v340
      %v342 = vpop.f32.mrb[0].mxu0
      %343 = vmatprep.mubr.f32.mxu0 0.0
      %344 = vmatmul.mubr.f32.gmra.mrb[0].mxu0 %v231
      %v345 = vpop.f32.mrb[0].mxu0
      %v346 = vadd.f32 %v262, %v345
      %v347 = vpop.f32.mrb[0].mxu0
      %348 = vmatprep.mubr.f32.mxu0 0.0
      %349 = vmatmul.mubr.f32.gmra.mrb[0].mxu0 %v232
      %v350 = vpop.f32.mrb[0].mxu0
      %v351 = vadd.f32 %v262, %v350
      %v352 = vpop.f32.mrb[0].mxu0
      %353 = vmatprep.mubr.f32.mxu0 0.0
      %354 = vmatmul.mubr.f32.gmra.mrb[0].mxu0 %v233
      %v355 = vpop.f32.mrb[0].mxu0
      %v356 = vadd.f32 %v262, %v355
      %v357 = vpop.f32.mrb[0].mxu0
      %358 = vmatprep.mubr.f32.mxu0 0.0
      %359 = vmatmul.mubr.f32.gmra.mrb[0].mxu0 %v234
      %v360 = vpop.f32.mrb[0].mxu0
      %v361 = vadd.f32 %v262, %v360
      %v362 = vpop.f32.mrb[0].mxu0
      %363 = vmatprep.mubr.f32.mxu0 0.0
      %364 = vmatmul.mubr.f32.gmra.mrb[0].mxu0 %v235
      %v365 = vpop.f32.mrb[0].mxu0
      %v366 = vadd.f32 %v262, %v365
      %v367 = vpop.f32.mrb[0].mxu0
      %368 = vdwg.mxu0
      %v369 = vmul.f32 %v331, 0.5
      %v370 = vmul.f32 %v336, 0.5
      %v371 = vmul.f32 %v341, 0.5
      %v372 = vmul.f32 %v346, 0.5
      %v373 = vmul.f32 %v351, 0.5
      %v374 = vmul.f32 %v356, 0.5
      %v375 = vmul.f32 %v361, 0.5
      %v376 = vmul.f32 %v366, 0.5
      %v377 = vmul.f32 %v331, 0.70710677
      %v378 = vmul.f32 %v336, 0.70710677
      %v379 = vmul.f32 %v341, 0.70710677
      %v380 = vmul.f32 %v346, 0.70710677
      %v381 = vmul.f32 %v351, 0.70710677
      %v382 = vmul.f32 %v356, 0.70710677
      %v383 = vmul.f32 %v361, 0.70710677
      %v384 = vmul.f32 %v366, 0.70710677
      %v385 = verf.f32.pop %v377
      %v386 = verf.f32.pop %v378
      %v387 = verf.f32.pop %v379
      %v388 = verf.f32.pop %v380
      %v389 = verf.f32.pop %v381
      %v390 = verf.f32.pop %v382
      %v391 = verf.f32.pop %v383
      %v392 = verf.f32.pop %v384
      %v393 = vadd.f32 %v385, 1.0
      %v394 = vadd.f32 %v386, 1.0
      %v395 = vadd.f32 %v387, 1.0
      %v396 = vadd.f32 %v388, 1.0
      %v397 = vadd.f32 %v389, 1.0
      %v398 = vadd.f32 %v390, 1.0
      %v399 = vadd.f32 %v391, 1.0
      %v400 = vadd.f32 %v392, 1.0
      %v401 = vmul.f32 %v369, %v393
      %v402 = vmul.f32 %v370, %v394
      %v403 = vmul.f32 %v371, %v395
      %v404 = vmul.f32 %v372, %v396
      %v405 = vmul.f32 %v373, %v397
      %v406 = vmul.f32 %v374, %v398
      %v407 = vmul.f32 %v375, %v399
      %v408 = vmul.f32 %v376, %v400
      %v410 = vlaneseq
      %v411 = vshrl.u32 %v410, 7
      %v412 = vsub.s32 0, %v411
      %v413 = vrot.slane %v257, %v412
      %vm415 = vcmask 261120
      %v417 = vsel %vm415, %v401, 0
      %v420 = vsel %vm415, %v402, 0
      %v423 = vsel %vm415, %v403, 0
      %v426 = vsel %vm415, %v404, 0
      %v429 = vsel %vm415, %v405, 0
      %v432 = vsel %vm415, %v406, 0
      %v435 = vsel %vm415, %v407, 0
      %v438 = vsel %vm415, %v408, 0
      %440 = vmatprep.subr.mxu0 0.0
      %441 = vmatpush1.msra.mxu0 %v252
      %442 = vmatprep.subr.mxu0 0.0
      %443 = vmatpush1.msra.mxu0 %v253
      %444 = vmatprep.subr.mxu0 0.0
      %445 = vmatpush1.msra.mxu0 %v254
      %446 = vmatprep.subr.mxu0 0.0
      %447 = vmatpush1.msra.mxu0 %v255
      %448 = vmatprep.subr.mxu0 0.0
      %449 = vmatpush1.msra.mxu0 0.0
      %450 = vmatprep.subr.mxu0 0.0
      %451 = vmatpush1.msra.mxu0 0.0
      %452 = vmatprep.subr.mxu0 0.0
      %453 = vmatpush1.msra.mxu0 0.0
      %454 = vmatprep.subr.mxu0 0.0
      %455 = vmatpush1.msra.mxu0 0.0
      %456 = vmatprep.subr.mxu0 0.0
      %457 = vmatpush1.msra.mxu0 0.0
      %458 = vmatprep.subr.mxu0 0.0
      %459 = vmatpush1.msra.mxu0 0.0
      %460 = vmatprep.subr.mxu0 0.0
      %461 = vmatpush1.msra.mxu0 0.0
      %462 = vmatprep.subr.mxu0 0.0
      %463 = vmatpush1.msra.mxu0 0.0
      %464 = vmatprep.subr.mxu0 0.0
      %465 = vmatpush1.msra.mxu0 0.0
      %466 = vmatprep.subr.mxu0 0.0
      %467 = vmatpush1.msra.mxu0 0.0
      %468 = vmatprep.subr.mxu0 0.0
      %469 = vmatpush1.msra.mxu0 0.0
      %470 = vmatprep.subr.mxu0 0.0
      %471 = vmatpush1.msra.mxu0 0.0
      %472 = vmatprep.subr.mxu0 0.0
      %473 = vmatpush1.msra.mxu0 0.0
      %474 = vmatprep.subr.mxu0 0.0
      %475 = vmatpush1.msra.mxu0 0.0
      %476 = vmatprep.subr.mxu0 0.0
      %477 = vmatpush1.msra.mxu0 0.0
      %478 = vmatprep.subr.mxu0 0.0
      %479 = vmatpush1.msra.mxu0 0.0
      %480 = vmatprep.subr.mxu0 0.0
      %481 = vmatpush1.msra.mxu0 0.0
      %482 = vmatprep.subr.mxu0 0.0
      %483 = vmatpush1.msra.mxu0 0.0
      %484 = vmatprep.subr.mxu0 0.0
      %485 = vmatpush1.msra.mxu0 0.0
      %486 = vmatprep.subr.mxu0 0.0
      %487 = vmatpush1.msra.mxu0 0.0
      %488 = vmatprep.subr.mxu0 0.0
      %489 = vmatpush1.msra.mxu0 0.0
      %490 = vmatprep.subr.mxu0 0.0
      %491 = vmatpush1.msra.mxu0 0.0
      %492 = vmatprep.subr.mxu0 0.0
      %493 = vmatpush1.msra.mxu0 0.0
      %494 = vmatprep.subr.mxu0 0.0
      %495 = vmatpush1.msra.mxu0 0.0
      %496 = vmatprep.subr.mxu0 0.0
      %497 = vmatpush1.msra.mxu0 0.0
      %498 = vmatprep.subr.mxu0 0.0
      %499 = vmatpush1.msra.mxu0 0.0
      %500 = vmatprep.subr.mxu0 0.0
      %501 = vmatpush1.msra.mxu0 0.0
      %502 = vmatprep.subr.mxu0 0.0
      %503 = vmatpush1.msra.mxu0 0.0
      %504 = vmatprep.mubr.f32.mxu0 0.0
      %505 = vmatmul.mubr.f32.gmra.mrb[0].mxu0 %v417
      %v506 = vpop.f32.mrb[0].mxu0
      %v507 = vadd.f32 %v413, %v506
      %v508 = vpop.f32.mrb[0].mxu0
      %509 = vmatprep.mubr.f32.mxu0 0.0
      %510 = vmatmul.mubr.f32.gmra.mrb[0].mxu0 %v420
      %v511 = vpop.f32.mrb[0].mxu0
      %v512 = vadd.f32 %v413, %v511
      %v513 = vpop.f32.mrb[0].mxu0
      %514 = vmatprep.mubr.f32.mxu0 0.0
      %515 = vmatmul.mubr.f32.gmra.mrb[0].mxu0 %v423
      %v516 = vpop.f32.mrb[0].mxu0
      %v517 = vadd.f32 %v413, %v516
      %v518 = vpop.f32.mrb[0].mxu0
      %519 = vmatprep.mubr.f32.mxu0 0.0
      %520 = vmatmul.mubr.f32.gmra.mrb[0].mxu0 %v426
      %v521 = vpop.f32.mrb[0].mxu0
      %v522 = vadd.f32 %v413, %v521
      %v523 = vpop.f32.mrb[0].mxu0
      %524 = vmatprep.mubr.f32.mxu0 0.0
      %525 = vmatmul.mubr.f32.gmra.mrb[0].mxu0 %v429
      %v526 = vpop.f32.mrb[0].mxu0
      %v527 = vadd.f32 %v413, %v526
      %v528 = vpop.f32.mrb[0].mxu0
      %529 = vmatprep.mubr.f32.mxu0 0.0
      %530 = vmatmul.mubr.f32.gmra.mrb[0].mxu0 %v432
      %v531 = vpop.f32.mrb[0].mxu0
      %v532 = vadd.f32 %v413, %v531
      %v533 = vpop.f32.mrb[0].mxu0
      %534 = vmatprep.mubr.f32.mxu0 0.0
      %535 = vmatmul.mubr.f32.gmra.mrb[0].mxu0 %v435
      %v536 = vpop.f32.mrb[0].mxu0
      %v537 = vadd.f32 %v413, %v536
      %v538 = vpop.f32.mrb[0].mxu0
      %539 = vmatprep.mubr.f32.mxu0 0.0
      %540 = vmatmul.mubr.f32.gmra.mrb[0].mxu0 %v438
      %v541 = vpop.f32.mrb[0].mxu0
      %v542 = vadd.f32 %v413, %v541
      %v543 = vpop.f32.mrb[0].mxu0
      %544 = vdwg.mxu0
      %545 = vst.msk [vmem:[%s226] sm:$0xff] %vm415, %v507
      %546 = vst.msk [vmem:[%s226 + $0x8] sm:$0xff] %vm415, %v512
      %547 = vst.msk [vmem:[%s226 + $0x10] sm:$0xff] %vm415, %v517
      %548 = vst.msk [vmem:[%s226 + $0x18] sm:$0xff] %vm415, %v522
      %549 = vst.msk [vmem:[%s226 + $0x20] sm:$0xff] %vm415, %v527
      %550 = vst.msk [vmem:[%s226 + $0x28] sm:$0xff] %vm415, %v532
      %551 = vst.msk [vmem:[%s226 + $0x30] sm:$0xff] %vm415, %v537
      %552 = vst.msk [vmem:[%s226 + $0x38] sm:$0xff] %vm415, %v542
      %s553 = smul.u32 8, %s16
      %p554 = scmp.lt.s32.totalorder %s553, 15
      %s555 = scalar_select %p554, %s553, 15
      %s556 = smul.addr %s555, 8
      %s557 = scalar_lea.vmem %s5, %s556
      // Predicated region
      $region41: #{pooler_projector.1} parent=39 // pred_check
        %p558 = pneg %p144
      $region42: #{pooler_projector.1} parent=39 // pred_check_branch
        %560 = sbr.rel (%p558) target = $region44
      $region43: #{pooler_projector.1} parent=39 // pred_region
        %s561 = smul.u32 8, %s16
      $region44: #{pooler_projector.1} parent=39 // pred_fallthru
        _
    $region40: #{pooler_projector.1} parent=5 // pred_fallthru
      _
    %p562 = scmp.le.s32.totalorder 2, %s11
    // Predicated region
    $region45: #{pooler_projector.1} parent=5 // pred_check
      %p563 = pneg %p562
    $region46: #{pooler_projector.1} parent=5 // pred_check_branch
      %565 = sbr.rel (%p563) target = $region48
    $region47: #{pooler_projector.1} parent=5 // pred_region
      %s566 = ssub.s32 %s11, 2
      // Predicated region
      $region49: #{pooler_projector.1} parent=47 // pred_check
        %p567 = pneg %p150
      $region50: #{pooler_projector.1} parent=47 // pred_check_branch
        %569 = sbr.rel (%p567) target = $region52
      $region51: #{pooler_projector.1} parent=47 // pred_region
        %s570 = smul.u32 8, %s17
        %p571 = scmp.lt.s32.totalorder %s570, 15
        %s572 = scalar_select %p571, %s570, 15
        %s573 = smul.addr %s572, 8
        %s574 = scalar_lea.vmem %s5, %s573
      $region52: #{pooler_projector.1} parent=47 // pred_fallthru
        _
    $region48: #{pooler_projector.1} parent=5 // pred_fallthru
      _
  $region6: #{pooler_projector.1} parent=0 // loop_footer
    %s15 = sadd.s32 1, %s11
  $region7: #{pooler_projector.1} parent=0 // loop_footer_branch
    %10 = sbr.rel target = $region3
  $region8: #{pooler_projector.1} parent=0 // loop_exit
    _

</llo_original>
